<compile_context>
chip_gen: v6e
topology: v6e:2x2x1
jax: 0.10.0
libtpu: 0.0.40
codegen_flags: <defaults>
</compile_context>

<pallas_src>
import jax
import jax.numpy as jnp
from jax.experimental import pallas as pl
from jax.experimental.pallas import tpu as pltpu


def _round_up(a, b):
    return (a + b - 1) // b * b


def _vmem_capacity_bytes():
    """Per-TensorCore VMEM capacity; conservative (v7x) fallback off-device."""
    try:
        return int(pltpu.get_tpu_info().vmem_capacity_bytes)
    except Exception:
        return 64 * 1024 * 1024


def _pick_tm(n, tm_max):
    """Row tile: multiple of 16 (bf16 sublane packing), <= tm_max, >= 2 row
    tiles when N allows (v7x megacore), exact divisor of N when possible."""
    cap = min(tm_max, _round_up(n, 16))
    if n > 16:
        cap = min(cap, _round_up(-(-n // 2), 16))   # guarantee >= 2 row tiles
    cap = max(16, cap - cap % 16)
    if n % 16 == 0:
        for cand in range(cap, 15, -16):
            if n % cand == 0:
                return cand
    return cap


def _pick_tv(v, tv_max):
    """Vocab tile: multiple of 128 (lane-dense stores), <= tv_max, exact
    divisor of V when possible so padding / final slice disappear."""
    cap = min(tv_max, _round_up(v, 128))
    cap = max(128, cap - cap % 128)
    if v % 128 == 0:
        for cand in range(cap, 127, -128):
            if v % cand == 0:
                return cand
    return cap


def _tile_vmem_bytes(tm, tv, d, mm_bytes, sc_bytes):
    per_step = (tm * d * mm_bytes      # x tile
                + tv * d * mm_bytes    # W tile (V, D layout)
                + tv * 4               # bias tile
                + tm * 4               # y tile
                + tm * tv * sc_bytes   # scores tile
                + tm * 4)              # per-row loss tile
    return 2 * per_step + 3 * tm * 4   # double-buffered tiles + f32 scratch


def _select_tiles(n, v, d, tm_max, tv_max, mm_bytes, sc_bytes, budget):
    tm = _pick_tm(n, tm_max)
    tv = _pick_tv(v, tv_max)
    while _tile_vmem_bytes(tm, tv, d, mm_bytes, sc_bytes) > budget and tv > 128:
        tv = _pick_tv(v, max(128, tv // 2))
    while _tile_vmem_bytes(tm, tv, d, mm_bytes, sc_bytes) > budget and tm > 16:
        tm = _pick_tm(n, max(16, tm // 2))
    return tm, tv


def pred_layer_kernel(x_ref, w_ref, b_ref, y_ref, scores_ref, loss_ref,
                      m_sc, l_sc, t_sc):
    # x_ref:      (TM, D)   matmul_dtype  VMEM
    # w_ref:      (TV, D)   matmul_dtype  VMEM   (original (V, D) layout, no repack)
    # b_ref:      (1, TV)   f32           VMEM
    # y_ref:      (TM, 1)   i32           VMEM
    # scores_ref: (TM, TV)  scores_dtype  VMEM out (logits tile)
    # loss_ref:   (TM, 1)   f32           VMEM out (per-row CE, written last vocab step)
    # m_sc/l_sc/t_sc: (TM, 1) f32 scratch (online-logsumexp state)
    j = pl.program_id(1)
    nv = pl.num_programs(1)

    @pl.when(j == 0)
    def _():
        m_sc[...] = jnp.full_like(m_sc, -jnp.inf)
        l_sc[...] = jnp.zeros_like(l_sc)
        t_sc[...] = jnp.zeros_like(t_sc)

    # (TM,D) @ (TV,D)^T on the MXU, f32 accumulation; bias add + softmax math f32.
    s = jax.lax.dot_general(
        x_ref[...], w_ref[...],
        dimension_numbers=(((1,), (1,)), ((), ())),
        preferred_element_type=jnp.float32) + b_ref[...]            # (TM, TV) f32
    scores_ref[...] = s.astype(scores_ref.dtype)

    tv = s.shape[1]

    # Target-score extraction restricted to this vocab tile.  Shift target ids
    # into tile-local coordinates ((TM,1) op) instead of offsetting the whole
    # (TM,TV) iota.
    y_loc = y_ref[...] - j * tv                                      # (TM, 1)
    col = jax.lax.broadcasted_iota(jnp.int32, s.shape, 1)            # local col ids
    t_sc[...] += jnp.sum(jnp.where(col == y_loc, s, 0.0),
                         axis=-1, keepdims=True)

    # Online logsumexp update.
    m_prev = m_sc[...]
    m_new = jnp.maximum(m_prev, jnp.max(s, axis=-1, keepdims=True))
    alpha = jnp.exp(m_prev - m_new)
    l_sc[...] = alpha * l_sc[...] + jnp.sum(jnp.exp(s - m_new),
                                            axis=-1, keepdims=True)
    m_sc[...] = m_new

    @pl.when(j == nv - 1)
    def _():
        lse = m_sc[...] + jnp.log(l_sc[...])
        loss_ref[...] = lse - t_sc[...]                              # per-row CE


def pred_layer_forward(x, y, weight, bias, pad_index, *,
                       tm=512, tv=2048,
                       matmul_dtype=jnp.bfloat16,
                       scores_dtype=jnp.float32,
                       validate_targets=False):
    """x: (..., D), y: (N,) int, weight: (V, D), bias: (V,).

    Returns (scores (N, V) scores_dtype, mean cross-entropy loss scalar f32).

    Precision notes (explicit, per review):
      * matmul_dtype=bf16: MXU operands are bf16 with f32 accumulation
        (~1e-3 relative error vs PyTorch's f32 F.linear).  Pass f32 to match
        the reference bit-for-bit (slower, 2x weight-stream traffic).  For
        best perf persist `weight` in bf16 in the param tree so the cast here
        is a no-op.
      * scores_dtype=f32 matches the module; bf16 halves the (N,V) HBM write.
      * validate_targets=True reproduces the module's pad_index assertion but
        forces a host sync; keep False inside jit'd training loops.
    """
    D = x.shape[-1]
    x = x.reshape(-1, D)
    N = x.shape[0]
    V = weight.shape[0]

    if validate_targets:
        assert int(jnp.sum(y == pad_index)) == 0

    mm_bytes = jnp.dtype(matmul_dtype).itemsize
    sc_bytes = jnp.dtype(scores_dtype).itemsize

    vmem_cap = _vmem_capacity_bytes()
    budget = int(vmem_cap * 0.55)             # leave headroom for compiler scratch
    TM, TV = _select_tiles(N, V, D, tm, tv, mm_bytes, sc_bytes, budget)

    N_pad = _round_up(N, TM)
    V_pad = _round_up(V, TV)
    row_pad = N_pad != N
    col_pad = V_pad != V

    # ---- operand prep (skip copies entirely when no padding is needed) ----
    if row_pad:
        x_mm = jnp.zeros((N_pad, D), matmul_dtype).at[:N].set(x.astype(matmul_dtype))
        y_in = jnp.zeros((N_pad, 1), jnp.int32).at[:N, 0].set(y.astype(jnp.int32))
    else:
        x_mm = x.astype(matmul_dtype)
        y_in = y.astype(jnp.int32).reshape(N, 1)

    # Weight keeps its (V, D) layout — no transpose repack pass.
    if col_pad:
        w_mm = jnp.zeros((V_pad, D), matmul_dtype).at[:V].set(
            weight.astype(matmul_dtype))
        # Padded vocab columns get a huge negative bias so they never win the
        # running max nor contribute to the sum-exp.
        b_in = jnp.full((1, V_pad), -1e30, jnp.float32).at[0, :V].set(
            bias.astype(jnp.float32))
    else:
        w_mm = weight.astype(matmul_dtype)
        b_in = bias.astype(jnp.float32).reshape(1, V)

    grid = (N_pad // TM, V_pad // TV)

    tile_bytes = _tile_vmem_bytes(TM, TV, D, mm_bytes, sc_bytes)
    vmem_limit = int(min(vmem_cap - (8 << 20),
                         max(32 << 20, int(tile_bytes * 1.4) + (4 << 20))))

    scores, per_row = pl.pallas_call(
        pred_layer_kernel,
        out_shape=(
            jax.ShapeDtypeStruct((N_pad, V_pad), scores_dtype),  # logits
            jax.ShapeDtypeStruct((N_pad, 1), jnp.float32),       # per-row CE
        ),
        grid_spec=pltpu.PrefetchScalarGridSpec(
            num_scalar_prefetch=0,
            grid=grid,
            in_specs=[
                pl.BlockSpec((TM, D), lambda i, j: (i, 0)),    # x
                pl.BlockSpec((TV, D), lambda i, j: (j, 0)),    # W (V, D) tiles
                pl.BlockSpec((1, TV), lambda i, j: (0, j)),    # bias
                pl.BlockSpec((TM, 1), lambda i, j: (i, 0)),    # y
            ],
            out_specs=(
                pl.BlockSpec((TM, TV), lambda i, j: (i, j)),   # scores tile
                pl.BlockSpec((TM, 1), lambda i, j: (i, 0)),    # per-row loss
            ),
            scratch_shapes=[pltpu.VMEM((TM, 1), jnp.float32)] * 3,
        ),
        compiler_params=pltpu.CompilerParams(
            # Row tiles shard across TensorCores (megacore); the vocab axis
            # carries the online-softmax state -> arbitrary.
            dimension_semantics=("parallel", "arbitrary"),
            vmem_limit_bytes=vmem_limit,
        ),
    )(x_mm, w_mm, b_in, y_in)

    if row_pad or col_pad:
        scores = scores[:N, :V]
    loss = jnp.mean(per_row[:N, 0])   # tiny final reduction in plain JAX
    return scores, loss


if __name__ == "__main__":
    # Small shapes consistent with the module: batch=2, seq=4, emb_dim=32,
    # n_words=128, pad_index=2.
    batch, seq, emb_dim, n_words, pad_index = 2, 4, 32, 128, 2
    N = batch * seq

    key = jax.random.PRNGKey(0)
    kx, kw, kb, ky = jax.random.split(key, 4)

    # Deterministic synthetic parameters (PyTorch Linear shapes: (V, D), (V,)).
    weight = (jax.random.normal(kw, (n_words, emb_dim), jnp.float32)
              * (1.0 / jnp.sqrt(emb_dim)))
    bias = jax.random.normal(kb, (n_words,), jnp.float32) * 0.01

    # Inputs: x as (batch, seq, D); targets avoid pad_index.
    x = jax.random.normal(kx, (batch, seq, emb_dim), jnp.float32)
    y = jax.random.randint(ky, (N,), pad_index + 1, n_words, jnp.int32)

    # Module's pad_index assertion, done once host-side (kept out of the hot path).
    assert int(jnp.sum(y == pad_index)) == 0

    scores, loss = pred_layer_forward(x, y, weight, bias, pad_index)
    jax.block_until_ready((scores, loss))

    # Reference with the same bf16-operand / f32-accumulate matmul.
    xf = x.reshape(-1, emb_dim)
    ref_scores = jnp.dot(xf.astype(jnp.bfloat16), weight.T.astype(jnp.bfloat16),
                         preferred_element_type=jnp.float32) + bias
    ref_lse = jax.scipy.special.logsumexp(ref_scores, axis=-1)
    ref_loss = jnp.mean(ref_lse - ref_scores[jnp.arange(N), y])
    assert jnp.allclose(scores, ref_scores, atol=2e-3, rtol=2e-3)
    assert jnp.allclose(loss, ref_loss, atol=2e-3, rtol=2e-3)

    # Pure-f32 reference with a looser tolerance (bf16 MXU operands introduce
    # ~1e-3 relative error — explicit precision choice, see matmul_dtype flag).
    f32_scores = xf @ weight.T + bias
    f32_lse = jax.scipy.special.logsumexp(f32_scores, axis=-1)
    f32_loss = jnp.mean(f32_lse - f32_scores[jnp.arange(N), y])
    assert jnp.allclose(loss, f32_loss, atol=5e-2, rtol=5e-2)

    print("KERNEL_OK")
</pallas_src>

<mosaic_0001>
module attributes {stable_mosaic.version = 11 : i64} {
  func.func @pred_layer_kernel(%arg0: i32, %arg1: i32, %arg2: memref<16x32xbf16, #tpu.memory_space<vmem>>, %arg3: memref<128x32xbf16, #tpu.memory_space<vmem>>, %arg4: memref<1x128xf32, #tpu.memory_space<vmem>>, %arg5: memref<16x1xi32, #tpu.memory_space<vmem>>, %arg6: memref<16x128xf32, #tpu.memory_space<vmem>>, %arg7: memref<16x1xf32, #tpu.memory_space<vmem>>, %arg8: memref<16x1xf32, #tpu.memory_space<vmem>>, %arg9: memref<16x1xf32, #tpu.memory_space<vmem>>, %arg10: memref<16x1xf32, #tpu.memory_space<vmem>>) attributes {dimension_semantics = [#tpu.dimension_semantics<parallel>, #tpu.dimension_semantics<arbitrary>], iteration_bounds = array<i64: 1, 1>, scalar_prefetch = 0 : i64, scratch_operands = 3 : i64, tpu.core_type = #tpu.core_type<tc>, window_params = [{transform_indices = @transform_0, window_bounds = array<i64: 16, 32>}, {transform_indices = @transform_1, window_bounds = array<i64: 128, 32>}, {transform_indices = @transform_2, window_bounds = array<i64: 1, 128>}, {transform_indices = @transform_3, window_bounds = array<i64: 16, 1>}, {transform_indices = @transform_4, window_bounds = array<i64: 16, 128>}, {transform_indices = @transform_5, window_bounds = array<i64: 16, 1>}]} {
    %c0_i32 = arith.constant 0 : i32
    %0 = arith.cmpi eq, %arg1, %c0_i32 : i32
    %1 = arith.extui %0 : i1 to i32
    %c0_i32_0 = arith.constant 0 : i32
    %2 = arith.cmpi ne, %1, %c0_i32_0 : i32
    scf.if %2 {
      %cst_28 = arith.constant 0xFF800000 : f32
      %43 = vector.broadcast %cst_28 : f32 to vector<16x1xf32>
      %c0_29 = arith.constant 0 : index
      %c0_30 = arith.constant 0 : index
      %44 = vector.load %arg8[%c0_29, %c0_30] : memref<16x1xf32, #tpu.memory_space<vmem>>, vector<16x1xf32>
      tpu.vector_store %arg8[%c0_29, %c0_30], %43 {strides = array<i32>} : memref<16x1xf32, #tpu.memory_space<vmem>>, vector<16x1xf32>,
      %cst_31 = arith.constant 0.000000e+00 : f32
      %45 = vector.broadcast %cst_31 : f32 to vector<16x1xf32>
      %c0_32 = arith.constant 0 : index
      %c0_33 = arith.constant 0 : index
      %46 = vector.load %arg9[%c0_32, %c0_33] : memref<16x1xf32, #tpu.memory_space<vmem>>, vector<16x1xf32>
      tpu.vector_store %arg9[%c0_32, %c0_33], %45 {strides = array<i32>} : memref<16x1xf32, #tpu.memory_space<vmem>>, vector<16x1xf32>,
      %cst_34 = arith.constant 0.000000e+00 : f32
      %47 = vector.broadcast %cst_34 : f32 to vector<16x1xf32>
      %c0_35 = arith.constant 0 : index
      %c0_36 = arith.constant 0 : index
      %48 = vector.load %arg10[%c0_35, %c0_36] : memref<16x1xf32, #tpu.memory_space<vmem>>, vector<16x1xf32>
      tpu.vector_store %arg10[%c0_35, %c0_36], %47 {strides = array<i32>} : memref<16x1xf32, #tpu.memory_space<vmem>>, vector<16x1xf32>,
    } else {
    }
    %c0 = arith.constant 0 : index
    %c0_1 = arith.constant 0 : index
    %3 = vector.load %arg2[%c0, %c0_1] : memref<16x32xbf16, #tpu.memory_space<vmem>>, vector<16x32xbf16>
    %c0_2 = arith.constant 0 : index
    %c0_3 = arith.constant 0 : index
    %4 = vector.load %arg3[%c0_2, %c0_3] : memref<128x32xbf16, #tpu.memory_space<vmem>>, vector<128x32xbf16>
    %cst = arith.constant dense<0.000000e+00> : vector<16x128xf32>
    %5 = tpu.matmul %3, %4, %cst {dimension_numbers = #tpu.dot_dimension_numbers<[1], [1], [0], [0], [0, 0, 1, 0], [], []>} : vector<16x32xbf16>, vector<128x32xbf16>, vector<16x128xf32> -> vector<16x128xf32>
    %c0_4 = arith.constant 0 : index
    %c0_5 = arith.constant 0 : index
    %6 = vector.load %arg4[%c0_4, %c0_5] : memref<1x128xf32, #tpu.memory_space<vmem>>, vector<1x128xf32>
    %7 = vector.broadcast %6 : vector<1x128xf32> to vector<16x128xf32>
    %8 = arith.addf %5, %7 : vector<16x128xf32>
    %c0_6 = arith.constant 0 : index
    %c0_7 = arith.constant 0 : index
    %9 = vector.load %arg6[%c0_6, %c0_7] : memref<16x128xf32, #tpu.memory_space<vmem>>, vector<16x128xf32>
    tpu.vector_store %arg6[%c0_6, %c0_7], %8 {strides = array<i32>} : memref<16x128xf32, #tpu.memory_space<vmem>>, vector<16x128xf32>,
    %c0_8 = arith.constant 0 : index
    %c0_9 = arith.constant 0 : index
    %10 = vector.load %arg5[%c0_8, %c0_9] : memref<16x1xi32, #tpu.memory_space<vmem>>, vector<16x1xi32>
    %c128_i32 = arith.constant 128 : i32
    %11 = arith.muli %arg1, %c128_i32 : i32
    %12 = vector.broadcast %11 : i32 to vector<16x1xi32>
    %13 = arith.subi %10, %12 : vector<16x1xi32>
    %14 = tpu.iota {dimensions = array<i32: 1>} : vector<16x128xi32>
    %c0_10 = arith.constant 0 : index
    %c0_11 = arith.constant 0 : index
    %15 = vector.load %arg10[%c0_10, %c0_11] : memref<16x1xf32, #tpu.memory_space<vmem>>, vector<16x1xf32>
    %16 = vector.broadcast %13 : vector<16x1xi32> to vector<16x128xi32>
    %17 = arith.cmpi eq, %14, %16 : vector<16x128xi32>
    %cst_12 = arith.constant 0.000000e+00 : f32
    %18 = vector.broadcast %cst_12 : f32 to vector<16x128xf32>
    %19 = arith.select %17, %8, %18 : vector<16x128xi1>, vector<16x128xf32>
    %cst_13 = arith.constant dense<0.000000e+00> : vector<16xf32>
    %20 = vector.multi_reduction <add>, %19, %cst_13 [1] : vector<16x128xf32> to vector<16xf32>
    %21 = vector.shape_cast %20 : vector<16xf32> to vector<16x1xf32>
    %22 = arith.addf %15, %21 : vector<16x1xf32>
    %c0_14 = arith.constant 0 : index
    %c0_15 = arith.constant 0 : index
    %23 = vector.load %arg10[%c0_14, %c0_15] : memref<16x1xf32, #tpu.memory_space<vmem>>, vector<16x1xf32>
    tpu.vector_store %arg10[%c0_14, %c0_15], %22 {strides = array<i32>} : memref<16x1xf32, #tpu.memory_space<vmem>>, vector<16x1xf32>,
    %c0_16 = arith.constant 0 : index
    %c0_17 = arith.constant 0 : index
    %24 = vector.load %arg8[%c0_16, %c0_17] : memref<16x1xf32, #tpu.memory_space<vmem>>, vector<16x1xf32>
    %cst_18 = arith.constant dense<0xFF800000> : vector<16xf32>
    %25 = vector.multi_reduction <maximumf>, %8, %cst_18 [1] : vector<16x128xf32> to vector<16xf32>
    %26 = vector.shape_cast %25 : vector<16xf32> to vector<16x1xf32>
    %27 = arith.maximumf %24, %26 : vector<16x1xf32>
    %28 = arith.subf %24, %27 : vector<16x1xf32>
    %29 = math.exp %28 : vector<16x1xf32>
    %c0_19 = arith.constant 0 : index
    %c0_20 = arith.constant 0 : index
    %30 = vector.load %arg9[%c0_19, %c0_20] : memref<16x1xf32, #tpu.memory_space<vmem>>, vector<16x1xf32>
    %31 = arith.mulf %29, %30 : vector<16x1xf32>
    %32 = vector.broadcast %27 : vector<16x1xf32> to vector<16x128xf32>
    %33 = arith.subf %8, %32 : vector<16x128xf32>
    %34 = math.exp %33 : vector<16x128xf32>
    %cst_21 = arith.constant dense<0.000000e+00> : vector<16xf32>
    %35 = vector.multi_reduction <add>, %34, %cst_21 [1] : vector<16x128xf32> to vector<16xf32>
    %36 = vector.shape_cast %35 : vector<16xf32> to vector<16x1xf32>
    %37 = arith.addf %31, %36 : vector<16x1xf32>
    %c0_22 = arith.constant 0 : index
    %c0_23 = arith.constant 0 : index
    %38 = vector.load %arg9[%c0_22, %c0_23] : memref<16x1xf32, #tpu.memory_space<vmem>>, vector<16x1xf32>
    tpu.vector_store %arg9[%c0_22, %c0_23], %37 {strides = array<i32>} : memref<16x1xf32, #tpu.memory_space<vmem>>, vector<16x1xf32>,
    %c0_24 = arith.constant 0 : index
    %c0_25 = arith.constant 0 : index
    %39 = vector.load %arg8[%c0_24, %c0_25] : memref<16x1xf32, #tpu.memory_space<vmem>>, vector<16x1xf32>
    tpu.vector_store %arg8[%c0_24, %c0_25], %27 {strides = array<i32>} : memref<16x1xf32, #tpu.memory_space<vmem>>, vector<16x1xf32>,
    %c0_i32_26 = arith.constant 0 : i32
    %40 = arith.cmpi eq, %arg1, %c0_i32_26 : i32
    %41 = arith.extui %40 : i1 to i32
    %c0_i32_27 = arith.constant 0 : i32
    %42 = arith.cmpi ne, %41, %c0_i32_27 : i32
    scf.if %42 {
      %c0_28 = arith.constant 0 : index
      %c0_29 = arith.constant 0 : index
      %43 = vector.load %arg8[%c0_28, %c0_29] : memref<16x1xf32, #tpu.memory_space<vmem>>, vector<16x1xf32>
      %c0_30 = arith.constant 0 : index
      %c0_31 = arith.constant 0 : index
      %44 = vector.load %arg9[%c0_30, %c0_31] : memref<16x1xf32, #tpu.memory_space<vmem>>, vector<16x1xf32>
      %45 = math.log %44 : vector<16x1xf32>
      %46 = arith.addf %43, %45 : vector<16x1xf32>
      %c0_32 = arith.constant 0 : index
      %c0_33 = arith.constant 0 : index
      %47 = vector.load %arg10[%c0_32, %c0_33] : memref<16x1xf32, #tpu.memory_space<vmem>>, vector<16x1xf32>
      %48 = arith.subf %46, %47 : vector<16x1xf32>
      %c0_34 = arith.constant 0 : index
      %c0_35 = arith.constant 0 : index
      %49 = vector.load %arg7[%c0_34, %c0_35] : memref<16x1xf32, #tpu.memory_space<vmem>>, vector<16x1xf32>
      tpu.vector_store %arg7[%c0_34, %c0_35], %48 {strides = array<i32>} : memref<16x1xf32, #tpu.memory_space<vmem>>, vector<16x1xf32>,
    } else {
    }
    return
  }
  func.func @transform_0(%arg0: i32, %arg1: i32) -> (i32, i32) {
    %c0_i32 = arith.constant 0 : i32
    %c0_i32_0 = arith.constant 0 : i32
    return %arg0, %c0_i32 : i32, i32
  }
  func.func @transform_1(%arg0: i32, %arg1: i32) -> (i32, i32) {
    %c0_i32 = arith.constant 0 : i32
    %c0_i32_0 = arith.constant 0 : i32
    return %arg1, %c0_i32 : i32, i32
  }
  func.func @transform_2(%arg0: i32, %arg1: i32) -> (i32, i32) {
    %c0_i32 = arith.constant 0 : i32
    %c0_i32_0 = arith.constant 0 : i32
    return %c0_i32, %arg1 : i32, i32
  }
  func.func @transform_3(%arg0: i32, %arg1: i32) -> (i32, i32) {
    %c0_i32 = arith.constant 0 : i32
    %c0_i32_0 = arith.constant 0 : i32
    return %arg0, %c0_i32 : i32, i32
  }
  func.func @transform_4(%arg0: i32, %arg1: i32) -> (i32, i32) {
    %c0_i32 = arith.constant 0 : i32
    return %arg0, %arg1 : i32, i32
  }
  func.func @transform_5(%arg0: i32, %arg1: i32) -> (i32, i32) {
    %c0_i32 = arith.constant 0 : i32
    %c0_i32_0 = arith.constant 0 : i32
    return %arg0, %c0_i32 : i32, i32
  }
}

</mosaic_0001>

<llo_original>
// kernel: tpu_custom_call.1
$region0: #{tpu_custom_call.1}
  #allocation0 [shape = 'u32[]', space=smem, size = 0x4, offset = 0x4, fixed_abs, tag = 'smem constant byte address 0x4 - core index']
  #allocation1 [shape = 'u32[144,128]{1,0:T(1,128)}', space=vmem, size = 0x12000, scoped, tag = 'internal scratch']
  #allocation2 [shape = 'f32[16,1]{1,0:T(8,128)}', space=vmem, size = 0x2000, scoped, tag = 'scratch operand']
  #allocation3 [shape = 'f32[16,1]{1,0:T(8,128)}', space=vmem, size = 0x2000, scoped, tag = 'scratch operand']
  #allocation4 [shape = 'f32[16,1]{1,0:T(8,128)}', space=vmem, size = 0x2000, scoped, tag = 'scratch operand']
  %s0 = inlined_call_operand.vmem [shape: bf16[16,32], index: 0, kind: input, shape index: {}]
  %s1 = inlined_call_operand.vmem [shape: bf16[128,32], index: 1, kind: input, shape index: {}]
  %s2 = inlined_call_operand.vmem [shape: f32[1,128], index: 2, kind: input, shape index: {}]
  %s3 = inlined_call_operand.vmem [shape: s32[16,1], index: 3, kind: input, shape index: {}]
  %s4 = inlined_call_operand.hbm [shape: f32[16,128], index: 4, kind: output, shape index: {0}]
  %s5 = inlined_call_operand.vmem [shape: f32[16,1], index: 5, kind: output, shape index: {1}]
  %6 = xla_tuple %s4, %s5
  %s7 = sld [smem:[#allocation0]]
  $region42: #{tpu_custom_call.1} parent=0
    _
  %s9 = ssub.s32 1, %s7
  %s10 = scalar_select 0, %s9, %s7
  $region1: #{tpu_custom_call.1} parent=0
    #allocation5 [shape = 'u8[8192]{0}', space=vmem, size = 0x2000, scoped, tag = 'output window, operand 0, single buffered']
    #allocation6 [shape = 's32[1]{0}', space=sflag, size = 0x4, scoped, tag = 'scoped memory for tpu_custom_call.1']
    %11 = vsyncpa [#allocation6], 0
    // Predicated region
    $region2: #{tpu_custom_call.1} parent=1 // pred_check
      _
    $region3: #{tpu_custom_call.1} parent=1 // pred_check_branch
      %13 = sbr.rel (0) target = $region5
    $region4: #{tpu_custom_call.1} parent=1 // pred_region
      _
    $region5: #{tpu_custom_call.1} parent=1 // pred_fallthru
      _
    // Predicated region
    $region6: #{tpu_custom_call.1} parent=1 // pred_check
      _
    $region7: #{tpu_custom_call.1} parent=1 // pred_check_branch
      %15 = sbr.rel (0) target = $region9
    $region8: #{tpu_custom_call.1} parent=1 // pred_region
      _
    $region9: #{tpu_custom_call.1} parent=1 // pred_fallthru
      _
    // Predicated region
    $region10: #{tpu_custom_call.1} parent=1 // pred_check
      _
    $region11: #{tpu_custom_call.1} parent=1 // pred_check_branch
      %17 = sbr.rel (0) target = $region13
    $region12: #{tpu_custom_call.1} parent=1 // pred_region
      _
    $region13: #{tpu_custom_call.1} parent=1 // pred_fallthru
      _
    // Predicated region
    $region14: #{tpu_custom_call.1} parent=1 // pred_check
      _
    $region15: #{tpu_custom_call.1} parent=1 // pred_check_branch
      %19 = sbr.rel (0) target = $region17
    $region16: #{tpu_custom_call.1} parent=1 // pred_region
      _
    $region17: #{tpu_custom_call.1} parent=1 // pred_fallthru
      _
    %p21 = scmp.eq.s32.totalorder 0, 0
    // Predicated region
    $region18: #{tpu_custom_call.1} parent=1 // pred_check
      %p22 = pneg %p21
    $region19: #{tpu_custom_call.1} parent=1 // pred_check_branch
      %24 = sbr.rel (%p22) target = $region21
    $region20: #{tpu_custom_call.1} parent=1 // pred_region
      %vm25 = vcmask 7168
      %26 = vst.msk [vmem:[#allocation2] sm:$0xff] %vm25, -inf
      %27 = vst.msk [vmem:[#allocation2 + $0x8] sm:$0xff] %vm25, -inf
      %28 = vst.msk [vmem:[#allocation3] sm:$0xff] %vm25, 0.0
      %29 = vst.msk [vmem:[#allocation3 + $0x8] sm:$0xff] %vm25, 0.0
      %30 = vst.msk [vmem:[#allocation4] sm:$0xff] %vm25, 0.0
      %31 = vst.msk [vmem:[#allocation4 + $0x8] sm:$0xff] %vm25, 0.0
    $region21: #{tpu_custom_call.1} parent=1 // pred_fallthru
      _
    %v32 = vld [vmem:[%s0] sm:$0xf]
    %v33 = vld [vmem:[%s0 + $0x4] sm:$0xf]
    %v34 = vld [vmem:[%s1] sm:$0xf]
    %v35 = vld [vmem:[%s1 + $0x4] sm:$0xf]
    %v36 = vld [vmem:[%s1 + $0x8] sm:$0xf]
    %v37 = vld [vmem:[%s1 + $0xc] sm:$0xf]
    %v38 = vld [vmem:[%s1 + $0x10] sm:$0xf]
    %v39 = vld [vmem:[%s1 + $0x14] sm:$0xf]
    %v40 = vld [vmem:[%s1 + $0x18] sm:$0xf]
    %v41 = vld [vmem:[%s1 + $0x1c] sm:$0xf]
    %v42 = vld [vmem:[%s1 + $0x20] sm:$0xf]
    %v43 = vld [vmem:[%s1 + $0x24] sm:$0xf]
    %v44 = vld [vmem:[%s1 + $0x28] sm:$0xf]
    %v45 = vld [vmem:[%s1 + $0x2c] sm:$0xf]
    %v46 = vld [vmem:[%s1 + $0x30] sm:$0xf]
    %v47 = vld [vmem:[%s1 + $0x34] sm:$0xf]
    %v48 = vld [vmem:[%s1 + $0x38] sm:$0xf]
    %v49 = vld [vmem:[%s1 + $0x3c] sm:$0xf]
    %v50 = vld [vmem:[%s2] sm:$0x1]
    %v52 = vlaneseq
    %v53 = vshrl.u32 %v52, 7
    %v54 = vsub.s32 0, %v53
    %v55 = vrot.slane %v50, %v54
    %v59 = vunpack.c.l.b16 %v32
    %v60 = vunpack.c.l.b16 %v33
    %v61 = vpack.c.b16 %v60, %v59
    %v78 = vunpack.c.l.b16 %v34
    %v79 = vunpack.c.l.b16 %v35
    %v80 = vunpack.c.l.b16 %v36
    %v81 = vunpack.c.l.b16 %v37
    %v82 = vunpack.c.l.b16 %v38
    %v83 = vunpack.c.l.b16 %v39
    %v84 = vunpack.c.l.b16 %v40
    %v85 = vunpack.c.l.b16 %v41
    %v86 = vunpack.c.l.b16 %v42
    %v87 = vunpack.c.l.b16 %v43
    %v88 = vunpack.c.l.b16 %v44
    %v89 = vunpack.c.l.b16 %v45
    %v90 = vunpack.c.l.b16 %v46
    %v91 = vunpack.c.l.b16 %v47
    %v92 = vunpack.c.l.b16 %v48
    %v93 = vunpack.c.l.b16 %v49
    %v94 = vpack.c.b16 %v79, %v78
    %v95 = vpack.c.b16 %v81, %v80
    %v96 = vpack.c.b16 %v83, %v82
    %v97 = vpack.c.b16 %v85, %v84
    %v98 = vpack.c.b16 %v87, %v86
    %v99 = vpack.c.b16 %v89, %v88
    %v100 = vpack.c.b16 %v91, %v90
    %v101 = vpack.c.b16 %v93, %v92
    %vm102 = vcmask 261120
    %v104 = vsel %vm102, %v61, 0
    %v107 = vsel %vm102, %v94, 0
    %v110 = vsel %vm102, %v95, 0
    %v113 = vsel %vm102, %v96, 0
    %v116 = vsel %vm102, %v97, 0
    %v119 = vsel %vm102, %v98, 0
    %v122 = vsel %vm102, %v99, 0
    %v125 = vsel %vm102, %v100, 0
    %v128 = vsel %vm102, %v101, 0
    %130 = vmatprep.subr.bf16.mxu0 0
    %131 = vmatpush1.bf16.xpose.msra.mxu0 %v128
    %132 = vmatprep.subr.bf16.mxu0 0
    %133 = vmatpush1.bf16.xpose.msra.mxu0 %v125
    %134 = vmatprep.subr.bf16.mxu0 0
    %135 = vmatpush1.bf16.xpose.msra.mxu0 %v122
    %136 = vmatprep.subr.bf16.mxu0 0
    %137 = vmatpush1.bf16.xpose.msra.mxu0 %v119
    %138 = vmatprep.subr.bf16.mxu0 0
    %139 = vmatpush1.bf16.xpose.msra.mxu0 %v116
    %140 = vmatprep.subr.bf16.mxu0 0
    %141 = vmatpush1.bf16.xpose.msra.mxu0 %v113
    %142 = vmatprep.subr.bf16.mxu0 0
    %143 = vmatpush1.bf16.xpose.msra.mxu0 %v110
    %144 = vmatprep.subr.bf16.mxu0 0
    %145 = vmatpush1.bf16.xpose.msra.mxu0 %v107
    %146 = vmatprep.subr.bf16.mxu0 0
    %147 = vmatpush2.bf16.xpose.msra.mxu0 0
    %148 = vmatprep.subr.bf16.mxu0 0
    %149 = vmatpush2.bf16.xpose.msra.mxu0 0
    %150 = vmatprep.subr.bf16.mxu0 0
    %151 = vmatpush2.bf16.xpose.msra.mxu0 0
    %152 = vmatprep.subr.bf16.mxu0 0
    %153 = vmatpush2.bf16.xpose.msra.mxu0 0
    %154 = vmatprep.subr.bf16.mxu0 0
    %155 = vmatpush2.bf16.xpose.msra.mxu0 0
    %156 = vmatprep.subr.bf16.mxu0 0
    %157 = vmatpush2.bf16.xpose.msra.mxu0 0
    %158 = vmatprep.subr.bf16.mxu0 0
    %159 = vmatpush2.bf16.xpose.msra.mxu0 0
    %160 = vmatprep.subr.bf16.mxu0 0
    %161 = vmatpush2.bf16.xpose.msra.mxu0 0
    %162 = vmatprep.mubr.bf16.mxu0 0
    %163 = vmatmul.mubr.bf16.gmra.mxu0 %v104
    %v164 = vpop.f32.mrf.mxu0
    %v165 = vadd.f32 %v55, %v164
    %v166 = vpop.f32.mrf.mxu0
    %v167 = vpop.f32.mrf.mxu0
    %v168 = vadd.f32 %v55, %v167
    %v169 = vpop.f32.mrf.mxu0
    %170 = vdwg.mxu0
    %171 = vst [vmem:[#allocation5] sm:$0xff] %v165
    %172 = vst [vmem:[#allocation5 + $0x8] sm:$0xff] %v168
    %v173 = vld [vmem:[%s3] sm:$0xff]
    %v174 = vld [vmem:[%s3 + $0x8] sm:$0xff]
    %s175 = smul.u32 0, 128
    %v176 = vstv %s175
    %v177 = vsub.s32 %v173, %v176
    %v178 = vsub.s32 %v174, %v176
    %v179 = vlaneseq
    %v180 = vand.u32 %v179, 127
    %v181 = vld [vmem:[#allocation4] sm:$0xff]
    %v182 = vld [vmem:[#allocation4 + $0x8] sm:$0xff]
    %183 = vset.pattern.permute.xlu0 0
    %184 = vperm.xlu0 %183, %v177
    %v185 = vpop.permute.xlu0 %184
    %186 = vset.pattern.permute.xlu0 0
    %187 = vperm.xlu0 %186, %v178
    %v188 = vpop.permute.xlu0 %187
    %vm189 = vcmp.eq.s32.totalorder %v180, %v185
    %vm190 = vcmp.eq.s32.totalorder %v180, %v188
    %v191 = vsel %vm189, %v165, 0.0
    %v192 = vsel %vm190, %v168, 0.0
    %193 = vadd.xlane.f32.xlu0 %v191
    %v194 = vpop.xlane.xlu0 %193
    %195 = vadd.xlane.f32.xlu0 %v192
    %v196 = vpop.xlane.xlu0 %195
    %v197 = vadd.f32 %v181, %v194
    %v198 = vadd.f32 %v182, %v196
    %vm199 = vcmask 7168
    %200 = vst.msk [vmem:[#allocation4] sm:$0xff] %vm199, %v197
    %201 = vst.msk [vmem:[#allocation4 + $0x8] sm:$0xff] %vm199, %v198
    %v202 = vld [vmem:[#allocation2] sm:$0xff]
    %v203 = vld [vmem:[#allocation2 + $0x8] sm:$0xff]
    %204 = vmax.xlane.f32.xlu0 %v165
    %v205 = vpop.xlane.xlu0 %204
    %206 = vmax.xlane.f32.xlu0 %v168
    %v207 = vpop.xlane.xlu0 %206
    %v208 = vmax.f32 %v202, %v205
    %v209 = vmax.f32 %v203, %v207
    %v210 = vsub.f32 %v202, %v208
    %v211 = vsub.f32 %v203, %v209
    %v212 = vmul.f32 %v210, 1.442695
    %v213 = vpow.pop %v212
    %v214 = vmul.f32 %v211, 1.442695
    %v215 = vpow.pop %v214
    %v216 = vld [vmem:[#allocation3] sm:$0xff]
    %v217 = vld [vmem:[#allocation3 + $0x8] sm:$0xff]
    %v218 = vmul.f32 %v213, %v216
    %v219 = vmul.f32 %v215, %v217
    %221 = vset.pattern.permute.xlu0 0
    %222 = vperm.xlu0 %221, %v208
    %v223 = vpop.permute.xlu0 %222
    %226 = vset.pattern.permute.xlu0 0
    %227 = vperm.xlu0 %226, %v209
    %v228 = vpop.permute.xlu0 %227
    %v230 = vsub.f32 %v165, %v223
    %v231 = vsub.f32 %v168, %v228
    %v232 = vmul.f32 %v230, 1.442695
    %v233 = vpow.pop %v232
    %v234 = vmul.f32 %v231, 1.442695
    %v235 = vpow.pop %v234
    %236 = vadd.xlane.f32.xlu0 %v233
    %v237 = vpop.xlane.xlu0 %236
    %238 = vadd.xlane.f32.xlu0 %v235
    %v239 = vpop.xlane.xlu0 %238
    %v240 = vadd.f32 %v218, %v237
    %v241 = vadd.f32 %v219, %v239
    %242 = vst.msk [vmem:[#allocation3] sm:$0xff] %vm199, %v240
    %243 = vst.msk [vmem:[#allocation3 + $0x8] sm:$0xff] %vm199, %v241
    %244 = vst.msk [vmem:[#allocation2] sm:$0xff] %vm199, %v208
    %245 = vst.msk [vmem:[#allocation2 + $0x8] sm:$0xff] %vm199, %v209
    // Predicated region
    $region22: #{tpu_custom_call.1} parent=1 // pred_check
      %p246 = pneg %p21
    $region23: #{tpu_custom_call.1} parent=1 // pred_check_branch
      %248 = sbr.rel (%p246) target = $region25
    $region24: #{tpu_custom_call.1} parent=1 // pred_region
      %v249 = vld [vmem:[#allocation2] sm:$0xff]
      %v250 = vld [vmem:[#allocation2 + $0x8] sm:$0xff]
      %v251 = vld [vmem:[#allocation3] sm:$0xff]
      %v252 = vld [vmem:[#allocation3 + $0x8] sm:$0xff]
      %v253 = vlog2.pop %v251
      %v254 = vmul.f32 %v253, 0.6931472
      %v255 = vlog2.pop %v252
      %v256 = vmul.f32 %v255, 0.6931472
      %v257 = vadd.f32 %v249, %v254
      %v258 = vadd.f32 %v250, %v256
      %v259 = vld [vmem:[#allocation4] sm:$0xff]
      %v260 = vld [vmem:[#allocation4 + $0x8] sm:$0xff]
      %v261 = vsub.f32 %v257, %v259
      %v262 = vsub.f32 %v258, %v260
      %263 = vst.msk [vmem:[%s5] sm:$0xff] %vm199, %v261
      %264 = vst.msk [vmem:[%s5 + $0x8] sm:$0xff] %vm199, %v262
    $region25: #{tpu_custom_call.1} parent=1 // pred_fallthru
      _
    // Predicated region
    $region26: #{tpu_custom_call.1} parent=1 // pred_check
      _
    $region27: #{tpu_custom_call.1} parent=1 // pred_check_branch
      %266 = sbr.rel (0) target = $region29
    $region28: #{tpu_custom_call.1} parent=1 // pred_region
      %s268 = ssub.s32 256, 256
      %269 = vsyncadd [#allocation6], %s268
      %s270 = sshll.u32 [#allocation5], 4
      %s271 = int_to_ptr.vmem [resolvable:$true] %s270
      %276 = dma.vmem_to_hbm [thread:$0]  %s271, 256, %s4, [#allocation6], 128, 128, 8
    $region29: #{tpu_custom_call.1} parent=1 // pred_fallthru
      _
    // Predicated region
    $region30: #{tpu_custom_call.1} parent=1 // pred_check
      _
    $region31: #{tpu_custom_call.1} parent=1 // pred_check_branch
      %278 = sbr.rel (0) target = $region33
    $region32: #{tpu_custom_call.1} parent=1 // pred_region
      _
    $region33: #{tpu_custom_call.1} parent=1 // pred_fallthru
      _
    // Predicated region
    $region34: #{tpu_custom_call.1} parent=1 // pred_check
      _
    $region35: #{tpu_custom_call.1} parent=1 // pred_check_branch
      %280 = sbr.rel (0) target = $region37
    $region36: #{tpu_custom_call.1} parent=1 // pred_region
      %281 = dma.done [#allocation6], 256
    $region37: #{tpu_custom_call.1} parent=1 // pred_fallthru
      _
    // Predicated region
    $region38: #{tpu_custom_call.1} parent=1 // pred_check
      _
    $region39: #{tpu_custom_call.1} parent=1 // pred_check_branch
      %283 = sbr.rel (0) target = $region41
    $region40: #{tpu_custom_call.1} parent=1 // pred_region
      _
    $region41: #{tpu_custom_call.1} parent=1 // pred_fallthru
      _
    %284 = vsyncpa [#allocation6], 1

</llo_original>
